<compile_context>
chip_gen: v5e
topology: v5e:2x2
jax: 0.10.0
libtpu: 0.0.40
codegen_flags: <defaults>
</compile_context>

<pallas_src>
import jax
import jax.numpy as jnp
from jax.experimental import pallas as pl
from jax.experimental.pallas import tpu as pltpu


LANE = 128            # TPU lane width: hidden/output dims are padded to this.
MAX_TILE_ROWS = 1024  # plenty of VMEM headroom even on v7x (64 MiB/TC)


def _round_up(n, m):
    return ((n + m - 1) // m) * m


def _make_kernel(num_layers, final_relu):
    """Fused multi-layer MLP on one row tile.

    Ref order: x, (w0, b0), (w1, b1), ..., out
      x:   (tile_rows, K0)       bf16
      w_l: (1, K_l, N_l)         bf16   (leading axis = selected MLP)
      b_l: (1, 1, N_l)           f32
      out: (tile_rows, N_last)   input dtype (f32)
    """
    def kernel(x_ref, *refs):
        out_ref = refs[-1]
        h = x_ref[...]                                   # bf16
        for l in range(num_layers):
            w = refs[2 * l][0]                           # (K_l, N_l) bf16
            b = refs[2 * l + 1][0]                       # (1, N_l)   f32
            # bf16 x bf16 -> f32 accumulation on the MXU.
            h = jnp.dot(h, w, preferred_element_type=jnp.float32) + b
            if l < num_layers - 1 or final_relu:
                h = jnp.maximum(h, 0.0)
            if l < num_layers - 1:
                h = h.astype(w.dtype)                    # back to bf16 for MXU
        out_ref[...] = h.astype(out_ref.dtype)           # f32 out, no bf16 trip
    return kernel


def _prepare_stack(params_list):
    """Pad to common lane-aligned dims, cast weights to bf16, and stack the
    MLPs along a new leading axis.  Done ONCE (hoisted out of forward)."""
    depth = len(params_list[0]["weights"])
    for p in params_list:
        assert len(p["weights"]) == depth, "stacked MLPs must share depth"

    # Layer-0 contraction dim stays at its true (max) width: padding the
    # narrow input dim to 128 would only inflate x's HBM read traffic.
    k0 = _round_up(max(p["weights"][0].shape[0] for p in params_list), 16)
    n_dims = [_round_up(max(p["weights"][l].shape[1] for p in params_list), LANE)
              for l in range(depth)]
    k_dims = [k0] + n_dims[:-1]

    stacked = []
    for l in range(depth):
        K, N = k_dims[l], n_dims[l]
        ws, bs = [], []
        for p in params_list:
            w, b = p["weights"][l], p["biases"][l]
            ws.append(jnp.pad(w.astype(jnp.bfloat16),
                              ((0, K - w.shape[0]), (0, N - w.shape[1]))))
            bs.append(jnp.pad(b.astype(jnp.float32).reshape(1, -1),
                              ((0, 0), (0, N - b.shape[0]))))
        stacked.append(jnp.stack(ws))       # (M, K, N) bf16
        stacked.append(jnp.stack(bs))       # (M, 1, N) f32
    meta = {
        "depth": depth,
        "k0": k0,
        "n_out": n_dims[-1],
        "out_dims": [p["weights"][-1].shape[1] for p in params_list],
    }
    return {"params": stacked, "meta": meta}


def _run_stacked(xs, stack_ids, prepared, *, final_relu=True,
                 max_tile_rows=MAX_TILE_ROWS):
    """Run len(xs) feature sets through their respective stacked MLPs in one
    pallas_call.  stack_ids[i] selects which stacked weight set xs[i] uses."""
    params = prepared["params"]
    meta = prepared["meta"]
    depth, k0, n_out = meta["depth"], meta["k0"], meta["n_out"]

    rows = [x.shape[0] for x in xs]
    # Adaptive row tile: one tile per feature set when small, capped at 1 K rows
    # (working set stays ~1 MiB, far under any generation's VMEM limit).
    tile_rows = max(LANE, min(max_tile_rows, _round_up(max(rows), LANE)))
    rows_p = [_round_up(r, tile_rows) for r in rows]
    tiles = [r // tile_rows for r in rows_p]
    boundaries, acc = [], 0
    for t in tiles:
        boundaries.append(acc)
        acc += t
    total_tiles = acc
    total_rows = sum(rows_p)

    # One fused pad + cast(bf16) + concat over the activations; padded rows /
    # columns are zero (padded weight rows are zero too, so no effect).
    x = jnp.concatenate([
        jnp.pad(xi.astype(jnp.bfloat16),
                ((0, rp - xi.shape[0]), (0, k0 - xi.shape[1])))
        for xi, rp in zip(xs, rows_p)], axis=0)

    def sel(i):
        # Map row-tile index -> stacked-MLP index (static boundaries).
        s = jnp.full((), stack_ids[0], jnp.int32)
        for b, sid in zip(boundaries[1:], stack_ids[1:]):
            s = jnp.where(i >= b, jnp.int32(sid), s)
        return s

    in_specs = [pl.BlockSpec((tile_rows, k0), lambda i: (i, 0))]
    for l in range(depth):
        K, N = params[2 * l].shape[1], params[2 * l].shape[2]
        in_specs.append(pl.BlockSpec((1, K, N), lambda i: (sel(i), 0, 0)))
        in_specs.append(pl.BlockSpec((1, 1, N), lambda i: (sel(i), 0, 0)))

    out_dtype = xs[0].dtype
    flops = 2 * total_rows * sum(int(params[2 * l].shape[1] * params[2 * l].shape[2])
                                 for l in range(depth))
    bytes_accessed = (int(x.size) * x.dtype.itemsize
                      + sum(int(p.size) * p.dtype.itemsize for p in params)
                      + total_rows * n_out * jnp.dtype(out_dtype).itemsize)

    out = pl.pallas_call(
        _make_kernel(depth, final_relu),
        out_shape=jax.ShapeDtypeStruct((total_rows, n_out), out_dtype),
        grid_spec=pltpu.PrefetchScalarGridSpec(
            num_scalar_prefetch=0,
            grid=(total_tiles,),
            in_specs=in_specs,
            out_specs=pl.BlockSpec((tile_rows, n_out), lambda i: (i, 0)),
        ),
        compiler_params=pltpu.CompilerParams(
            dimension_semantics=("parallel",)),
        cost_estimate=pl.CostEstimate(flops=int(flops), transcendentals=0,
                                      bytes_accessed=int(bytes_accessed)),
    )(x, *params)

    outs, row_off = [], 0
    for xi, rp, sid in zip(xs, rows_p, stack_ids):
        d_out = meta["out_dims"][sid]
        outs.append(out[row_off:row_off + xi.shape[0], :d_out])
        row_off += rp
    return outs


def prepare_mlp_graph_independent(edge_params=None, node_params=None):
    """One-time parameter prep (pad / cast / stack).  Fuses both MLPs into one
    stacked parameter set when their depths match."""
    prepared = {"fused": None, "edge": None, "node": None}
    if (edge_params is not None and node_params is not None
            and len(edge_params["weights"]) == len(node_params["weights"])):
        prepared["fused"] = _prepare_stack([edge_params, node_params])
    else:
        if edge_params is not None:
            prepared["edge"] = _prepare_stack([edge_params])
        if node_params is not None:
            prepared["node"] = _prepare_stack([node_params])
    return prepared


def mlp_graph_independent_forward(edge_feats=None, node_feats=None, *,
                                  prepared, final_relu=True):
    """Pallas equivalent of MLPGraphIndependent.forward.

    Returns (out_edge_feats, out_node_feats); missing MLPs / inputs pass
    through unchanged, exactly like the PyTorch module.
    """
    out_edge, out_node = edge_feats, node_feats
    fused = prepared.get("fused")
    if fused is not None and edge_feats is not None and node_feats is not None:
        out_edge, out_node = _run_stacked([edge_feats, node_feats], [0, 1],
                                          fused, final_relu=final_relu)
    else:
        if fused is not None:
            if edge_feats is not None:
                (out_edge,) = _run_stacked([edge_feats], [0], fused,
                                           final_relu=final_relu)
            if node_feats is not None:
                (out_node,) = _run_stacked([node_feats], [1], fused,
                                           final_relu=final_relu)
        if prepared.get("edge") is not None and edge_feats is not None:
            (out_edge,) = _run_stacked([edge_feats], [0], prepared["edge"],
                                       final_relu=final_relu)
        if prepared.get("node") is not None and node_feats is not None:
            (out_node,) = _run_stacked([node_feats], [0], prepared["node"],
                                       final_relu=final_relu)
    return out_edge, out_node


def init_mlp_params(key, input_dim, fc_dims, dtype=jnp.float32):
    """PyTorch-nn.Linear-style uniform init; weights stored as (in, out)."""
    dims = [input_dim] + list(fc_dims)
    keys = jax.random.split(key, 2 * (len(dims) - 1))
    weights, biases = [], []
    for l in range(len(dims) - 1):
        lim = 1.0 / (dims[l] ** 0.5)
        weights.append(jax.random.uniform(keys[2 * l], (dims[l], dims[l + 1]),
                                          dtype, -lim, lim))
        biases.append(jax.random.uniform(keys[2 * l + 1], (dims[l + 1],),
                                         dtype, -lim, lim))
    return {"weights": weights, "biases": biases}


def mlp_reference(x, weights, biases, final_relu=True):
    """Plain-JAX f32 reference matching the PyTorch MLP semantics."""
    h = x
    for l, (w, b) in enumerate(zip(weights, biases)):
        h = h @ w + b
        if l < len(weights) - 1 or final_relu:
            h = jnp.maximum(h, 0.0)
    return h


if __name__ == "__main__":
    key = jax.random.PRNGKey(0)
    k_e, k_n, k_ep, k_np = jax.random.split(key, 4)

    # Small graph; node / edge MLPs have different in / hidden / out dims to
    # exercise the padded, stacked fused path.
    num_edges, num_nodes = 512, 384
    edge_in, edge_fc_dims, edge_out = 16, [64], 32
    node_in, node_fc_dims, node_out = 32, [96], 48

    edge_feats = jax.random.normal(k_e, (num_edges, edge_in), jnp.float32)
    node_feats = jax.random.normal(k_n, (num_nodes, node_in), jnp.float32)

    edge_params = init_mlp_params(k_ep, edge_in, list(edge_fc_dims) + [edge_out])
    node_params = init_mlp_params(k_np, node_in, list(node_fc_dims) + [node_out])

    # Hoisted one-time parameter prep (pad / bf16 cast / stack).
    prepared = prepare_mlp_graph_independent(edge_params=edge_params,
                                             node_params=node_params)

    fwd = jax.jit(lambda e, n: mlp_graph_independent_forward(
        edge_feats=e, node_feats=n, prepared=prepared))
    out_edge, out_node = jax.block_until_ready(fwd(edge_feats, node_feats))

    ref_edge = mlp_reference(edge_feats, edge_params["weights"], edge_params["biases"])
    ref_node = mlp_reference(node_feats, node_params["weights"], node_params["biases"])

    assert out_edge.shape == (num_edges, edge_out)
    assert out_node.shape == (num_nodes, node_out)
    assert out_edge.dtype == edge_feats.dtype and out_node.dtype == node_feats.dtype
    # bf16 activations/weights with f32 accumulation -> ~0.5% relative error.
    assert jnp.allclose(out_edge, ref_edge, atol=5e-2, rtol=5e-2)
    assert jnp.allclose(out_node, ref_node, atol=5e-2, rtol=5e-2)

    # TODO(synk): dropout / batchnorm branches of the inner MLP are not
    # implemented (inference-time no-ops in this module's usage).
    print("KERNEL_OK")
</pallas_src>

<mosaic_0001>
module attributes {stable_mosaic.version = 11 : i64} {
  func.func @kernel(%arg0: i32, %arg1: memref<512x32xbf16, #tpu.memory_space<vmem>>, %arg2: memref<1x32x128xbf16, #tpu.memory_space<vmem>>, %arg3: memref<1x1x128xf32, #tpu.memory_space<vmem>>, %arg4: memref<1x128x128xbf16, #tpu.memory_space<vmem>>, %arg5: memref<1x1x128xf32, #tpu.memory_space<vmem>>, %arg6: memref<512x128xf32, #tpu.memory_space<vmem>>) attributes {dimension_semantics = [#tpu.dimension_semantics<parallel>], iteration_bounds = array<i64: 2>, scalar_prefetch = 0 : i64, scratch_operands = 0 : i64, tpu.core_type = #tpu.core_type<tc>, window_params = [{transform_indices = @transform_0, window_bounds = array<i64: 512, 32>}, {transform_indices = @transform_1, window_bounds = array<i64: 1, 32, 128>}, {transform_indices = @transform_2, window_bounds = array<i64: 1, 1, 128>}, {transform_indices = @transform_3, window_bounds = array<i64: 1, 128, 128>}, {transform_indices = @transform_4, window_bounds = array<i64: 1, 1, 128>}, {transform_indices = @transform_5, window_bounds = array<i64: 512, 128>}]} {
    %c0 = arith.constant 0 : index
    %c0_0 = arith.constant 0 : index
    %0 = vector.load %arg1[%c0, %c0_0] : memref<512x32xbf16, #tpu.memory_space<vmem>>, vector<512x32xbf16>
    %c0_1 = arith.constant 0 : index
    %c0_2 = arith.constant 0 : index
    %c0_3 = arith.constant 0 : index
    %1 = vector.load %arg2[%c0_1, %c0_2, %c0_3] : memref<1x32x128xbf16, #tpu.memory_space<vmem>>, vector<1x32x128xbf16>
    %2 = vector.shape_cast %1 : vector<1x32x128xbf16> to vector<32x128xbf16>
    %c0_4 = arith.constant 0 : index
    %c0_5 = arith.constant 0 : index
    %c0_6 = arith.constant 0 : index
    %3 = vector.load %arg3[%c0_4, %c0_5, %c0_6] : memref<1x1x128xf32, #tpu.memory_space<vmem>>, vector<1x1x128xf32>
    %4 = vector.shape_cast %3 : vector<1x1x128xf32> to vector<1x128xf32>
    %cst = arith.constant dense<0.000000e+00> : vector<512x128xf32>
    %5 = tpu.matmul %0, %2, %cst {dimension_numbers = #tpu.dot_dimension_numbers<[1], [0], [0], [1], [0, 0, 1, 1], [], []>} : vector<512x32xbf16>, vector<32x128xbf16>, vector<512x128xf32> -> vector<512x128xf32>
    %6 = vector.broadcast %4 : vector<1x128xf32> to vector<512x128xf32>
    %7 = arith.addf %5, %6 : vector<512x128xf32>
    %cst_7 = arith.constant 0.000000e+00 : f32
    %8 = vector.broadcast %cst_7 : f32 to vector<512x128xf32>
    %9 = arith.maximumf %7, %8 : vector<512x128xf32>
    %10 = arith.truncf %9 : vector<512x128xf32> to vector<512x128xbf16>
    %c0_8 = arith.constant 0 : index
    %c0_9 = arith.constant 0 : index
    %c0_10 = arith.constant 0 : index
    %11 = vector.load %arg4[%c0_8, %c0_9, %c0_10] : memref<1x128x128xbf16, #tpu.memory_space<vmem>>, vector<1x128x128xbf16>
    %12 = vector.shape_cast %11 : vector<1x128x128xbf16> to vector<128x128xbf16>
    %c0_11 = arith.constant 0 : index
    %c0_12 = arith.constant 0 : index
    %c0_13 = arith.constant 0 : index
    %13 = vector.load %arg5[%c0_11, %c0_12, %c0_13] : memref<1x1x128xf32, #tpu.memory_space<vmem>>, vector<1x1x128xf32>
    %14 = vector.shape_cast %13 : vector<1x1x128xf32> to vector<1x128xf32>
    %cst_14 = arith.constant dense<0.000000e+00> : vector<512x128xf32>
    %15 = tpu.matmul %10, %12, %cst_14 {dimension_numbers = #tpu.dot_dimension_numbers<[1], [0], [0], [1], [0, 0, 1, 1], [], []>} : vector<512x128xbf16>, vector<128x128xbf16>, vector<512x128xf32> -> vector<512x128xf32>
    %16 = vector.broadcast %14 : vector<1x128xf32> to vector<512x128xf32>
    %17 = arith.addf %15, %16 : vector<512x128xf32>
    %cst_15 = arith.constant 0.000000e+00 : f32
    %18 = vector.broadcast %cst_15 : f32 to vector<512x128xf32>
    %19 = arith.maximumf %17, %18 : vector<512x128xf32>
    %c0_16 = arith.constant 0 : index
    %c0_17 = arith.constant 0 : index
    %20 = vector.load %arg6[%c0_16, %c0_17] : memref<512x128xf32, #tpu.memory_space<vmem>>, vector<512x128xf32>
    tpu.vector_store %arg6[%c0_16, %c0_17], %19 {strides = array<i32>} : memref<512x128xf32, #tpu.memory_space<vmem>>, vector<512x128xf32>,
    return
  }
  func.func @transform_0(%arg0: i32) -> (i32, i32) {
    %c0_i32 = arith.constant 0 : i32
    %c0_i32_0 = arith.constant 0 : i32
    return %arg0, %c0_i32 : i32, i32
  }
  func.func @transform_1(%arg0: i32) -> (i32, i32, i32) {
    %c1_i32 = arith.constant 1 : i32
    %0 = arith.cmpi sge, %arg0, %c1_i32 : i32
    %c1_i32_0 = arith.constant 1 : i32
    %c0_i32 = arith.constant 0 : i32
    %1 = arith.select %0, %c1_i32_0, %c0_i32 : i32
    %c0_i32_1 = arith.constant 0 : i32
    %c0_i32_2 = arith.constant 0 : i32
    %c0_i32_3 = arith.constant 0 : i32
    return %1, %c0_i32_1, %c0_i32_2 : i32, i32, i32
  }
  func.func @transform_2(%arg0: i32) -> (i32, i32, i32) {
    %c1_i32 = arith.constant 1 : i32
    %0 = arith.cmpi sge, %arg0, %c1_i32 : i32
    %c1_i32_0 = arith.constant 1 : i32
    %c0_i32 = arith.constant 0 : i32
    %1 = arith.select %0, %c1_i32_0, %c0_i32 : i32
    %c0_i32_1 = arith.constant 0 : i32
    %c0_i32_2 = arith.constant 0 : i32
    %c0_i32_3 = arith.constant 0 : i32
    return %1, %c0_i32_1, %c0_i32_2 : i32, i32, i32
  }
  func.func @transform_3(%arg0: i32) -> (i32, i32, i32) {
    %c1_i32 = arith.constant 1 : i32
    %0 = arith.cmpi sge, %arg0, %c1_i32 : i32
    %c1_i32_0 = arith.constant 1 : i32
    %c0_i32 = arith.constant 0 : i32
    %1 = arith.select %0, %c1_i32_0, %c0_i32 : i32
    %c0_i32_1 = arith.constant 0 : i32
    %c0_i32_2 = arith.constant 0 : i32
    %c0_i32_3 = arith.constant 0 : i32
    return %1, %c0_i32_1, %c0_i32_2 : i32, i32, i32
  }
  func.func @transform_4(%arg0: i32) -> (i32, i32, i32) {
    %c1_i32 = arith.constant 1 : i32
    %0 = arith.cmpi sge, %arg0, %c1_i32 : i32
    %c1_i32_0 = arith.constant 1 : i32
    %c0_i32 = arith.constant 0 : i32
    %1 = arith.select %0, %c1_i32_0, %c0_i32 : i32
    %c0_i32_1 = arith.constant 0 : i32
    %c0_i32_2 = arith.constant 0 : i32
    %c0_i32_3 = arith.constant 0 : i32
    return %1, %c0_i32_1, %c0_i32_2 : i32, i32, i32
  }
  func.func @transform_5(%arg0: i32) -> (i32, i32) {
    %c0_i32 = arith.constant 0 : i32
    %c0_i32_0 = arith.constant 0 : i32
    return %arg0, %c0_i32 : i32, i32
  }
}

</mosaic_0001>

<llo_original>
// kernel: _lambda_.1
$region0: #{_lambda_.1}
  #allocation0 [shape = 'u32[]', space=smem, size = 0x4, offset = 0x4, fixed_abs, tag = 'smem constant byte address 0x4 - core index']
  #allocation1 [shape = 'u32[72,128]{1,0:T(1,128)}', space=vmem, size = 0x9000, scoped, tag = 'internal scratch']
  %s0 = inlined_call_operand.vmem [shape: bf16[1024,32], index: 0, kind: input, shape index: {}]
  %s1 = inlined_call_operand.vmem [shape: bf16[2,32,128], index: 1, kind: input, shape index: {}]
  %s2 = inlined_call_operand.vmem [shape: f32[2,1,128], index: 2, kind: input, shape index: {}]
  %s3 = inlined_call_operand.vmem [shape: bf16[2,128,128], index: 3, kind: input, shape index: {}]
  %s4 = inlined_call_operand.vmem [shape: f32[2,1,128], index: 4, kind: input, shape index: {}]
  %s5 = inlined_call_operand.vmem [shape: f32[1024,128], index: 5, kind: output, shape index: {}]
  %s6 = sld [smem:[#allocation0]]
  $region53: #{_lambda_.1} parent=0
    _
  %s8 = ssub.s32 1, %s6
  %s9 = scalar_select 0, %s8, %s6
  loop: start=0, step=1, limit=4
  $region2: #{_lambda_.1} parent=0 // loop_pre_header
    _
  $region3: #{_lambda_.1} parent=0 // loop_header
    %s11 = sphi 0, %s15
    %p12 = scmp.ge.s32.totalorder %s11, 4
    %s21 = sphi 0, %s23
    %s24 = sphi 0, %s21
    %s25 = sphi 0, %s24
    %s41 = sphi 0, %s25
    %s51 = sphi 0, %s53
    %s54 = sphi 0, %s51
    %s55 = sphi 0, %s54
    %s71 = sphi 0, %s55
    %s81 = sphi 0, %s83
    %s84 = sphi 0, %s81
    %s85 = sphi 0, %s84
    %s101 = sphi 0, %s85
    %s111 = sphi 0, %s113
    %s114 = sphi 0, %s111
    %s115 = sphi 0, %s114
    %s131 = sphi 0, %s115
    %s141 = sphi 0, %s143
    %s144 = sphi 0, %s141
    %s145 = sphi 0, %s144
    %s161 = sphi 0, %s145
    %s167 = sphi 0, %s169
    %s170 = sphi 0, %s167
    %s171 = sphi 0, %s170
    %s187 = sphi 0, %s171
  $region4: #{_lambda_.1} parent=0 // loop_header_branch
    %14 = sbr.rel (%p12) target = $region8
  $region5: #{_lambda_.1} parent=0 // loop_body
    %s16 = ssub.s32 %s11, 1
    %s17 = ssub.s32 %s11, 2
    %s18 = sadd.s32 %s11, 1
    %s19 = ssub.s32 %s11, %s18
    %p20 = scmp.eq.s32.totalorder %s19, 0
    %s22 = sadd.s32 %s21, 1
    %s23 = scalar_select %p20, %s21, %s22
    %p26 = pneg %p20
    %p27 = scmp.eq.s32.totalorder %s11, 1
    %p28 = por %p26, %p27
    %p29 = scmp.ne.s32.totalorder %s21, %s24
    %p30 = scmp.eq.s32.totalorder %s11, 0
    %p31 = por %p29, %p30
    %p32 = scmp.ne.s32.totalorder %s21, %s24
    %p33 = scmp.eq.s32.totalorder %s16, 1
    %p34 = por %p32, %p33
    %p35 = scmp.ne.s32.totalorder %s24, %s25
    %p36 = scmp.eq.s32.totalorder %s16, 0
    %p37 = por %p35, %p36
    %p38 = scmp.ne.s32.totalorder %s24, %s25
    %p39 = scmp.eq.s32.totalorder %s17, 1
    %p40 = por %p38, %p39
    %p42 = scmp.ne.s32.totalorder %s25, %s41
    %p43 = scmp.eq.s32.totalorder %s17, 0
    %p44 = por %p42, %p43
    %p45 = scmp.ge.s32.totalorder %s11, 1
    %s46 = scalar_select %p45, 1, 0
    %p47 = scmp.ge.s32.totalorder %s18, 1
    %s48 = scalar_select %p47, 1, 0
    %s49 = ssub.s32 %s46, %s48
    %p50 = scmp.eq.s32.totalorder %s49, 0
    %s52 = sadd.s32 %s51, 1
    %s53 = scalar_select %p50, %s51, %s52
    %p56 = pneg %p50
    %p57 = scmp.eq.s32.totalorder %s11, 1
    %p58 = por %p56, %p57
    %p59 = scmp.ne.s32.totalorder %s51, %s54
    %p60 = scmp.eq.s32.totalorder %s11, 0
    %p61 = por %p59, %p60
    %p62 = scmp.ne.s32.totalorder %s51, %s54
    %p63 = scmp.eq.s32.totalorder %s16, 1
    %p64 = por %p62, %p63
    %p65 = scmp.ne.s32.totalorder %s54, %s55
    %p66 = scmp.eq.s32.totalorder %s16, 0
    %p67 = por %p65, %p66
    %p68 = scmp.ne.s32.totalorder %s54, %s55
    %p69 = scmp.eq.s32.totalorder %s17, 1
    %p70 = por %p68, %p69
    %p72 = scmp.ne.s32.totalorder %s55, %s71
    %p73 = scmp.eq.s32.totalorder %s17, 0
    %p74 = por %p72, %p73
    %p75 = scmp.ge.s32.totalorder %s11, 1
    %s76 = scalar_select %p75, 1, 0
    %p77 = scmp.ge.s32.totalorder %s18, 1
    %s78 = scalar_select %p77, 1, 0
    %s79 = ssub.s32 %s76, %s78
    %p80 = scmp.eq.s32.totalorder %s79, 0
    %s82 = sadd.s32 %s81, 1
    %s83 = scalar_select %p80, %s81, %s82
    %p86 = pneg %p80
    %p87 = scmp.eq.s32.totalorder %s11, 1
    %p88 = por %p86, %p87
    %p89 = scmp.ne.s32.totalorder %s81, %s84
    %p90 = scmp.eq.s32.totalorder %s11, 0
    %p91 = por %p89, %p90
    %p92 = scmp.ne.s32.totalorder %s81, %s84
    %p93 = scmp.eq.s32.totalorder %s16, 1
    %p94 = por %p92, %p93
    %p95 = scmp.ne.s32.totalorder %s84, %s85
    %p96 = scmp.eq.s32.totalorder %s16, 0
    %p97 = por %p95, %p96
    %p98 = scmp.ne.s32.totalorder %s84, %s85
    %p99 = scmp.eq.s32.totalorder %s17, 1
    %p100 = por %p98, %p99
    %p102 = scmp.ne.s32.totalorder %s85, %s101
    %p103 = scmp.eq.s32.totalorder %s17, 0
    %p104 = por %p102, %p103
    %p105 = scmp.ge.s32.totalorder %s11, 1
    %s106 = scalar_select %p105, 1, 0
    %p107 = scmp.ge.s32.totalorder %s18, 1
    %s108 = scalar_select %p107, 1, 0
    %s109 = ssub.s32 %s106, %s108
    %p110 = scmp.eq.s32.totalorder %s109, 0
    %s112 = sadd.s32 %s111, 1
    %s113 = scalar_select %p110, %s111, %s112
    %p116 = pneg %p110
    %p117 = scmp.eq.s32.totalorder %s11, 1
    %p118 = por %p116, %p117
    %p119 = scmp.ne.s32.totalorder %s111, %s114
    %p120 = scmp.eq.s32.totalorder %s11, 0
    %p121 = por %p119, %p120
    %p122 = scmp.ne.s32.totalorder %s111, %s114
    %p123 = scmp.eq.s32.totalorder %s16, 1
    %p124 = por %p122, %p123
    %p125 = scmp.ne.s32.totalorder %s114, %s115
    %p126 = scmp.eq.s32.totalorder %s16, 0
    %p127 = por %p125, %p126
    %p128 = scmp.ne.s32.totalorder %s114, %s115
    %p129 = scmp.eq.s32.totalorder %s17, 1
    %p130 = por %p128, %p129
    %p132 = scmp.ne.s32.totalorder %s115, %s131
    %p133 = scmp.eq.s32.totalorder %s17, 0
    %p134 = por %p132, %p133
    %p135 = scmp.ge.s32.totalorder %s11, 1
    %s136 = scalar_select %p135, 1, 0
    %p137 = scmp.ge.s32.totalorder %s18, 1
    %s138 = scalar_select %p137, 1, 0
    %s139 = ssub.s32 %s136, %s138
    %p140 = scmp.eq.s32.totalorder %s139, 0
    %s142 = sadd.s32 %s141, 1
    %s143 = scalar_select %p140, %s141, %s142
    %p146 = pneg %p140
    %p147 = scmp.eq.s32.totalorder %s11, 1
    %p148 = por %p146, %p147
    %p149 = scmp.ne.s32.totalorder %s141, %s144
    %p150 = scmp.eq.s32.totalorder %s11, 0
    %p151 = por %p149, %p150
    %p152 = scmp.ne.s32.totalorder %s141, %s144
    %p153 = scmp.eq.s32.totalorder %s16, 1
    %p154 = por %p152, %p153
    %p155 = scmp.ne.s32.totalorder %s144, %s145
    %p156 = scmp.eq.s32.totalorder %s16, 0
    %p157 = por %p155, %p156
    %p158 = scmp.ne.s32.totalorder %s144, %s145
    %p159 = scmp.eq.s32.totalorder %s17, 1
    %p160 = por %p158, %p159
    %p162 = scmp.ne.s32.totalorder %s145, %s161
    %p163 = scmp.eq.s32.totalorder %s17, 0
    %p164 = por %p162, %p163
    %s165 = ssub.s32 %s11, %s18
    %p166 = scmp.eq.s32.totalorder %s165, 0
    %s168 = sadd.s32 %s167, 1
    %s169 = scalar_select %p166, %s167, %s168
    %p172 = pneg %p166
    %p173 = scmp.eq.s32.totalorder %s11, 1
    %p174 = por %p172, %p173
    %p175 = scmp.ne.s32.totalorder %s167, %s170
    %p176 = scmp.eq.s32.totalorder %s11, 0
    %p177 = por %p175, %p176
    %p178 = scmp.ne.s32.totalorder %s167, %s170
    %p179 = scmp.eq.s32.totalorder %s16, 1
    %p180 = por %p178, %p179
    %p181 = scmp.ne.s32.totalorder %s170, %s171
    %p182 = scmp.eq.s32.totalorder %s16, 0
    %p183 = por %p181, %p182
    %p184 = scmp.ne.s32.totalorder %s170, %s171
    %p185 = scmp.eq.s32.totalorder %s17, 1
    %p186 = por %p184, %p185
    %p188 = scmp.ne.s32.totalorder %s171, %s187
    %p189 = scmp.eq.s32.totalorder %s17, 0
    %p190 = por %p188, %p189
    %p191 = scmp.le.s32.totalorder 1, %s11
    %p192 = scmp.lt.s32.totalorder %s11, 3
    %p193 = pnand %p191, %p192
    %p194 = pneg %p193
    // Predicated region
    $region9: #{_lambda_.1} parent=5 // pred_check
      _
    $region10: #{_lambda_.1} parent=5 // pred_check_branch
      %196 = sbr.rel (%p193) target = $region12
    $region11: #{_lambda_.1} parent=5 // pred_region
      %s197 = ssub.s32 %s11, 1
    $region12: #{_lambda_.1} parent=5 // pred_fallthru
      _
    %p198 = scmp.lt.s32.totalorder %s11, 2
    // Predicated region
    $region13: #{_lambda_.1} parent=5 // pred_check
      %p199 = pneg %p198
    $region14: #{_lambda_.1} parent=5 // pred_check_branch
      %201 = sbr.rel (%p199) target = $region16
    $region15: #{_lambda_.1} parent=5 // pred_region
      // Predicated region
      $region17: #{_lambda_.1} parent=15 // pred_check
        %p202 = pneg %p31
      $region18: #{_lambda_.1} parent=15 // pred_check_branch
        %204 = sbr.rel (%p202) target = $region20
      $region19: #{_lambda_.1} parent=15 // pred_region
        %s205 = smul.u32 64, %s11
        %p206 = scmp.lt.s32.totalorder %s205, 127
        %s207 = scalar_select %p206, %s205, 127
        %s208 = smul.addr %s207, 4
        %s209 = scalar_lea.vmem %s0, %s208
        %s210 = smul.u32 64, %s11
      $region20: #{_lambda_.1} parent=15 // pred_fallthru
        _
      // Predicated region
      $region21: #{_lambda_.1} parent=15 // pred_check
        %p211 = pneg %p61
      $region22: #{_lambda_.1} parent=15 // pred_check_branch
        %213 = sbr.rel (%p211) target = $region24
      $region23: #{_lambda_.1} parent=15 // pred_region
        %p214 = scmp.ge.s32.totalorder %s11, 1
        %s215 = scalar_select %p214, 1, 0
        %p216 = scmp.lt.s32.totalorder %s215, 1
        %s217 = scalar_select %p216, %s215, 1
        %s218 = smul.addr %s217, 4
        %s219 = smul.addr %s218, 4
        %s220 = scalar_lea.vmem %s1, %s219
        %p221 = scmp.ge.s32.totalorder %s11, 1
        %s222 = scalar_select %p221, 1, 0
      $region24: #{_lambda_.1} parent=15 // pred_fallthru
        _
      // Predicated region
      $region25: #{_lambda_.1} parent=15 // pred_check
        %p223 = pneg %p91
      $region26: #{_lambda_.1} parent=15 // pred_check_branch
        %225 = sbr.rel (%p223) target = $region28
      $region27: #{_lambda_.1} parent=15 // pred_region
        %p226 = scmp.ge.s32.totalorder %s11, 1
        %s227 = scalar_select %p226, 1, 0
        %p228 = scmp.lt.s32.totalorder %s227, 1
        %s229 = scalar_select %p228, %s227, 1
        %s230 = scalar_lea.vmem %s2, %s229
        %p231 = scmp.ge.s32.totalorder %s11, 1
        %s232 = scalar_select %p231, 1, 0
      $region28: #{_lambda_.1} parent=15 // pred_fallthru
        _
      // Predicated region
      $region29: #{_lambda_.1} parent=15 // pred_check
        %p233 = pneg %p121
      $region30: #{_lambda_.1} parent=15 // pred_check_branch
        %235 = sbr.rel (%p233) target = $region32
      $region31: #{_lambda_.1} parent=15 // pred_region
        %p236 = scmp.ge.s32.totalorder %s11, 1
        %s237 = scalar_select %p236, 1, 0
        %p238 = scmp.lt.s32.totalorder %s237, 1
        %s239 = scalar_select %p238, %s237, 1
        %s240 = smul.addr %s239, 16
        %s241 = smul.addr %s240, 4
        %s242 = scalar_lea.vmem %s3, %s241
        %p243 = scmp.ge.s32.totalorder %s11, 1
        %s244 = scalar_select %p243, 1, 0
      $region32: #{_lambda_.1} parent=15 // pred_fallthru
        _
      // Predicated region
      $region33: #{_lambda_.1} parent=15 // pred_check
        %p245 = pneg %p151
      $region34: #{_lambda_.1} parent=15 // pred_check_branch
        %247 = sbr.rel (%p245) target = $region36
      $region35: #{_lambda_.1} parent=15 // pred_region
        %p248 = scmp.ge.s32.totalorder %s11, 1
        %s249 = scalar_select %p248, 1, 0
        %p250 = scmp.lt.s32.totalorder %s249, 1
        %s251 = scalar_select %p250, %s249, 1
        %s252 = scalar_lea.vmem %s4, %s251
        %p253 = scmp.ge.s32.totalorder %s11, 1
        %s254 = scalar_select %p253, 1, 0
      $region36: #{_lambda_.1} parent=15 // pred_fallthru
        _
    $region16: #{_lambda_.1} parent=5 // pred_fallthru
      _
    %p255 = scmp.le.s32.totalorder 1, %s11
    %p256 = scmp.lt.s32.totalorder %s11, 3
    %p257 = pnand %p255, %p256
    %p258 = pneg %p257
    // Predicated region
    $region37: #{_lambda_.1} parent=5 // pred_check
      _
    $region38: #{_lambda_.1} parent=5 // pred_check_branch
      %260 = sbr.rel (%p257) target = $region40
    $region39: #{_lambda_.1} parent=5 // pred_region
      %s261 = ssub.s32 %s11, 1
      %s262 = smul.u32 64, %s16
      %p263 = scmp.lt.s32.totalorder %s262, 127
      %s264 = scalar_select %p263, %s262, 127
      %s265 = smul.addr %s264, 4
      %s266 = scalar_lea.vmem %s0, %s265
      %p267 = pneg %p37
      %p268 = pneg %p34
      %p269 = scmp.ge.s32.totalorder %s16, 1
      %s270 = scalar_select %p269, 1, 0
      %p271 = scmp.lt.s32.totalorder %s270, 1
      %s272 = scalar_select %p271, %s270, 1
      %s273 = smul.addr %s272, 4
      %s274 = smul.addr %s273, 4
      %s275 = scalar_lea.vmem %s1, %s274
      %p276 = pneg %p67
      %p277 = pneg %p64
      %p278 = scmp.ge.s32.totalorder %s16, 1
      %s279 = scalar_select %p278, 1, 0
      %p280 = scmp.lt.s32.totalorder %s279, 1
      %s281 = scalar_select %p280, %s279, 1
      %s282 = scalar_lea.vmem %s2, %s281
      %p283 = pneg %p97
      %p284 = pneg %p94
      %p285 = scmp.ge.s32.totalorder %s16, 1
      %s286 = scalar_select %p285, 1, 0
      %p287 = scmp.lt.s32.totalorder %s286, 1
      %s288 = scalar_select %p287, %s286, 1
      %s289 = smul.addr %s288, 16
      %s290 = smul.addr %s289, 4
      %s291 = scalar_lea.vmem %s3, %s290
      %p292 = pneg %p127
      %p293 = pneg %p124
      %p294 = scmp.ge.s32.totalorder %s16, 1
      %s295 = scalar_select %p294, 1, 0
      %p296 = scmp.lt.s32.totalorder %s295, 1
      %s297 = scalar_select %p296, %s295, 1
      %s298 = scalar_lea.vmem %s4, %s297
      %p299 = pneg %p157
      %p300 = pneg %p154
      %p301 = pneg %p183
      %p302 = pneg %p180
      %s303 = smul.u32 64, %s16
      %p304 = scmp.lt.s32.totalorder %s303, 127
      %s305 = scalar_select %p304, %s303, 127
      %s306 = smul.addr %s305, 8
      %s307 = scalar_lea.vmem %s5, %s306
      %s308 = smul.u32 64, %s16
      %p309 = scmp.lt.s32.totalorder %s308, 127
      %s310 = scalar_select %p309, %s308, 127
      %s311 = smul.addr %s310, 4
      %s312 = scalar_lea.vmem %s0, %s311
      %s313 = smul.u32 64, %s16
      %p314 = scmp.ge.s32.totalorder %s16, 1
      %s315 = scalar_select %p314, 1, 0
      %p316 = scmp.lt.s32.totalorder %s315, 1
      %s317 = scalar_select %p316, %s315, 1
      %s318 = smul.addr %s317, 4
      %s319 = smul.addr %s318, 4
      %s320 = scalar_lea.vmem %s1, %s319
      %p321 = scmp.ge.s32.totalorder %s16, 1
      %s322 = scalar_select %p321, 1, 0
      %p323 = scmp.ge.s32.totalorder %s16, 1
      %s324 = scalar_select %p323, 1, 0
      %p325 = scmp.lt.s32.totalorder %s324, 1
      %s326 = scalar_select %p325, %s324, 1
      %s327 = scalar_lea.vmem %s2, %s326
      %p328 = scmp.ge.s32.totalorder %s16, 1
      %s329 = scalar_select %p328, 1, 0
      %p330 = scmp.ge.s32.totalorder %s16, 1
      %s331 = scalar_select %p330, 1, 0
      %p332 = scmp.lt.s32.totalorder %s331, 1
      %s333 = scalar_select %p332, %s331, 1
      %s334 = smul.addr %s333, 16
      %s335 = smul.addr %s334, 4
      %s336 = scalar_lea.vmem %s3, %s335
      %p337 = scmp.ge.s32.totalorder %s16, 1
      %s338 = scalar_select %p337, 1, 0
      %p339 = scmp.ge.s32.totalorder %s16, 1
      %s340 = scalar_select %p339, 1, 0
      %p341 = scmp.lt.s32.totalorder %s340, 1
      %s342 = scalar_select %p341, %s340, 1
      %s343 = scalar_lea.vmem %s4, %s342
      %p344 = scmp.ge.s32.totalorder %s16, 1
      %s345 = scalar_select %p344, 1, 0
      %s346 = smul.u32 64, %s16
      %p347 = scmp.lt.s32.totalorder %s346, 127
      %s348 = scalar_select %p347, %s346, 127
      %s349 = smul.addr %s348, 8
      %s350 = scalar_lea.vmem %s5, %s349
      %s351 = smul.u32 64, %s16
      %v353 = vld [vmem:[%s312] sm:$0xf]
      %v354 = vld [vmem:[%s312 + $0x4] sm:$0xf]
      %v355 = vld [vmem:[%s312 + $0x8] sm:$0xf]
      %v356 = vld [vmem:[%s312 + $0xc] sm:$0xf]
      %v357 = vld [vmem:[%s312 + $0x10] sm:$0xf]
      %v358 = vld [vmem:[%s312 + $0x14] sm:$0xf]
      %v359 = vld [vmem:[%s312 + $0x18] sm:$0xf]
      %v360 = vld [vmem:[%s312 + $0x1c] sm:$0xf]
      %v361 = vld [vmem:[%s312 + $0x20] sm:$0xf]
      %v362 = vld [vmem:[%s312 + $0x24] sm:$0xf]
      %v363 = vld [vmem:[%s312 + $0x28] sm:$0xf]
      %v364 = vld [vmem:[%s312 + $0x2c] sm:$0xf]
      %v365 = vld [vmem:[%s312 + $0x30] sm:$0xf]
      %v366 = vld [vmem:[%s312 + $0x34] sm:$0xf]
      %v367 = vld [vmem:[%s312 + $0x38] sm:$0xf]
      %v368 = vld [vmem:[%s312 + $0x3c] sm:$0xf]
      %v369 = vld [vmem:[%s312 + $0x40] sm:$0xf]
      %v370 = vld [vmem:[%s312 + $0x44] sm:$0xf]
      %v371 = vld [vmem:[%s312 + $0x48] sm:$0xf]
      %v372 = vld [vmem:[%s312 + $0x4c] sm:$0xf]
      %v373 = vld [vmem:[%s312 + $0x50] sm:$0xf]
      %v374 = vld [vmem:[%s312 + $0x54] sm:$0xf]
      %v375 = vld [vmem:[%s312 + $0x58] sm:$0xf]
      %v376 = vld [vmem:[%s312 + $0x5c] sm:$0xf]
      %v377 = vld [vmem:[%s312 + $0x60] sm:$0xf]
      %v378 = vld [vmem:[%s312 + $0x64] sm:$0xf]
      %v379 = vld [vmem:[%s312 + $0x68] sm:$0xf]
      %v380 = vld [vmem:[%s312 + $0x6c] sm:$0xf]
      %v381 = vld [vmem:[%s312 + $0x70] sm:$0xf]
      %v382 = vld [vmem:[%s312 + $0x74] sm:$0xf]
      %v383 = vld [vmem:[%s312 + $0x78] sm:$0xf]
      %v384 = vld [vmem:[%s312 + $0x7c] sm:$0xf]
      %v385 = vld [vmem:[%s312 + $0x80] sm:$0xf]
      %v386 = vld [vmem:[%s312 + $0x84] sm:$0xf]
      %v387 = vld [vmem:[%s312 + $0x88] sm:$0xf]
      %v388 = vld [vmem:[%s312 + $0x8c] sm:$0xf]
      %v389 = vld [vmem:[%s312 + $0x90] sm:$0xf]
      %v390 = vld [vmem:[%s312 + $0x94] sm:$0xf]
      %v391 = vld [vmem:[%s312 + $0x98] sm:$0xf]
      %v392 = vld [vmem:[%s312 + $0x9c] sm:$0xf]
      %v393 = vld [vmem:[%s312 + $0xa0] sm:$0xf]
      %v394 = vld [vmem:[%s312 + $0xa4] sm:$0xf]
      %v395 = vld [vmem:[%s312 + $0xa8] sm:$0xf]
      %v396 = vld [vmem:[%s312 + $0xac] sm:$0xf]
      %v397 = vld [vmem:[%s312 + $0xb0] sm:$0xf]
      %v398 = vld [vmem:[%s312 + $0xb4] sm:$0xf]
      %v399 = vld [vmem:[%s312 + $0xb8] sm:$0xf]
      %v400 = vld [vmem:[%s312 + $0xbc] sm:$0xf]
      %v401 = vld [vmem:[%s312 + $0xc0] sm:$0xf]
      %v402 = vld [vmem:[%s312 + $0xc4] sm:$0xf]
      %v403 = vld [vmem:[%s312 + $0xc8] sm:$0xf]
      %v404 = vld [vmem:[%s312 + $0xcc] sm:$0xf]
      %v405 = vld [vmem:[%s312 + $0xd0] sm:$0xf]
      %v406 = vld [vmem:[%s312 + $0xd4] sm:$0xf]
      %v407 = vld [vmem:[%s312 + $0xd8] sm:$0xf]
      %v408 = vld [vmem:[%s312 + $0xdc] sm:$0xf]
      %v409 = vld [vmem:[%s312 + $0xe0] sm:$0xf]
      %v410 = vld [vmem:[%s312 + $0xe4] sm:$0xf]
      %v411 = vld [vmem:[%s312 + $0xe8] sm:$0xf]
      %v412 = vld [vmem:[%s312 + $0xec] sm:$0xf]
      %v413 = vld [vmem:[%s312 + $0xf0] sm:$0xf]
      %v414 = vld [vmem:[%s312 + $0xf4] sm:$0xf]
      %v415 = vld [vmem:[%s312 + $0xf8] sm:$0xf]
      %v416 = vld [vmem:[%s312 + $0xfc] sm:$0xf]
      %v417 = vld [vmem:[%s320] sm:$0xf]
      %v418 = vld [vmem:[%s320 + $0x4] sm:$0xf]
      %v419 = vld [vmem:[%s320 + $0x8] sm:$0xf]
      %v420 = vld [vmem:[%s320 + $0xc] sm:$0xf]
      %v421 = vld [vmem:[%s327] sm:$0x1]
      %v423 = vperm.slane %v421, 0
      %v489 = vunpack.c.l.b16 %v353
      %v490 = vunpack.c.l.b16 %v354
      %v491 = vunpack.c.l.b16 %v355
      %v492 = vunpack.c.l.b16 %v356
      %v493 = vunpack.c.l.b16 %v357
      %v494 = vunpack.c.l.b16 %v358
      %v495 = vunpack.c.l.b16 %v359
      %v496 = vunpack.c.l.b16 %v360
      %v497 = vunpack.c.l.b16 %v361
      %v498 = vunpack.c.l.b16 %v362
      %v499 = vunpack.c.l.b16 %v363
      %v500 = vunpack.c.l.b16 %v364
      %v501 = vunpack.c.l.b16 %v365
      %v502 = vunpack.c.l.b16 %v366
      %v503 = vunpack.c.l.b16 %v367
      %v504 = vunpack.c.l.b16 %v368
      %v505 = vunpack.c.l.b16 %v369
      %v506 = vunpack.c.l.b16 %v370
      %v507 = vunpack.c.l.b16 %v371
      %v508 = vunpack.c.l.b16 %v372
      %v509 = vunpack.c.l.b16 %v373
      %v510 = vunpack.c.l.b16 %v374
      %v511 = vunpack.c.l.b16 %v375
      %v512 = vunpack.c.l.b16 %v376
      %v513 = vunpack.c.l.b16 %v377
      %v514 = vunpack.c.l.b16 %v378
      %v515 = vunpack.c.l.b16 %v379
      %v516 = vunpack.c.l.b16 %v380
      %v517 = vunpack.c.l.b16 %v381
      %v518 = vunpack.c.l.b16 %v382
      %v519 = vunpack.c.l.b16 %v383
      %v520 = vunpack.c.l.b16 %v384
      %v521 = vunpack.c.l.b16 %v385
      %v522 = vunpack.c.l.b16 %v386
      %v523 = vunpack.c.l.b16 %v387
      %v524 = vunpack.c.l.b16 %v388
      %v525 = vunpack.c.l.b16 %v389
      %v526 = vunpack.c.l.b16 %v390
      %v527 = vunpack.c.l.b16 %v391
      %v528 = vunpack.c.l.b16 %v392
      %v529 = vunpack.c.l.b16 %v393
      %v530 = vunpack.c.l.b16 %v394
      %v531 = vunpack.c.l.b16 %v395
      %v532 = vunpack.c.l.b16 %v396
      %v533 = vunpack.c.l.b16 %v397
      %v534 = vunpack.c.l.b16 %v398
      %v535 = vunpack.c.l.b16 %v399
      %v536 = vunpack.c.l.b16 %v400
      %v537 = vunpack.c.l.b16 %v401
      %v538 = vunpack.c.l.b16 %v402
      %v539 = vunpack.c.l.b16 %v403
      %v540 = vunpack.c.l.b16 %v404
      %v541 = vunpack.c.l.b16 %v405
      %v542 = vunpack.c.l.b16 %v406
      %v543 = vunpack.c.l.b16 %v407
      %v544 = vunpack.c.l.b16 %v408
      %v545 = vunpack.c.l.b16 %v409
      %v546 = vunpack.c.l.b16 %v410
      %v547 = vunpack.c.l.b16 %v411
      %v548 = vunpack.c.l.b16 %v412
      %v549 = vunpack.c.l.b16 %v413
      %v550 = vunpack.c.l.b16 %v414
      %v551 = vunpack.c.l.b16 %v415
      %v552 = vunpack.c.l.b16 %v416
      %v553 = vpack.c.b16 %v490, %v489
      %v554 = vpack.c.b16 %v492, %v491
      %v555 = vpack.c.b16 %v494, %v493
      %v556 = vpack.c.b16 %v496, %v495
      %v557 = vpack.c.b16 %v498, %v497
      %v558 = vpack.c.b16 %v500, %v499
      %v559 = vpack.c.b16 %v502, %v501
      %v560 = vpack.c.b16 %v504, %v503
      %v561 = vpack.c.b16 %v506, %v505
      %v562 = vpack.c.b16 %v508, %v507
      %v563 = vpack.c.b16 %v510, %v509
      %v564 = vpack.c.b16 %v512, %v511
      %v565 = vpack.c.b16 %v514, %v513
      %v566 = vpack.c.b16 %v516, %v515
      %v567 = vpack.c.b16 %v518, %v517
      %v568 = vpack.c.b16 %v520, %v519
      %v569 = vpack.c.b16 %v522, %v521
      %v570 = vpack.c.b16 %v524, %v523
      %v571 = vpack.c.b16 %v526, %v525
      %v572 = vpack.c.b16 %v528, %v527
      %v573 = vpack.c.b16 %v530, %v529
      %v574 = vpack.c.b16 %v532, %v531
      %v575 = vpack.c.b16 %v534, %v533
      %v576 = vpack.c.b16 %v536, %v535
      %v577 = vpack.c.b16 %v538, %v537
      %v578 = vpack.c.b16 %v540, %v539
      %v579 = vpack.c.b16 %v542, %v541
      %v580 = vpack.c.b16 %v544, %v543
      %v581 = vpack.c.b16 %v546, %v545
      %v582 = vpack.c.b16 %v548, %v547
      %v583 = vpack.c.b16 %v550, %v549
      %v584 = vpack.c.b16 %v552, %v551
      %v589 = vunpack.c.l.b16 %v417
      %v590 = vunpack.c.l.b16 %v418
      %v591 = vunpack.c.l.b16 %v419
      %v592 = vunpack.c.l.b16 %v420
      %v593 = vpack.c.b16 %v590, %v589
      %v594 = vpack.c.b16 %v592, %v591
      %vm597 = vcmask 261120
      %v599 = vsel %vm597, %v553, 0
      %v602 = vsel %vm597, %v554, 0
      %v605 = vsel %vm597, %v555, 0
      %v608 = vsel %vm597, %v556, 0
      %v611 = vsel %vm597, %v557, 0
      %v614 = vsel %vm597, %v558, 0
      %v617 = vsel %vm597, %v559, 0
      %v620 = vsel %vm597, %v560, 0
      %v623 = vsel %vm597, %v561, 0
      %v626 = vsel %vm597, %v562, 0
      %v629 = vsel %vm597, %v563, 0
      %v632 = vsel %vm597, %v564, 0
      %v635 = vsel %vm597, %v565, 0
      %v638 = vsel %vm597, %v566, 0
      %v641 = vsel %vm597, %v567, 0
      %v644 = vsel %vm597, %v568, 0
      %v647 = vsel %vm597, %v569, 0
      %v650 = vsel %vm597, %v570, 0
      %v653 = vsel %vm597, %v571, 0
      %v656 = vsel %vm597, %v572, 0
      %v659 = vsel %vm597, %v573, 0
      %v662 = vsel %vm597, %v574, 0
      %v665 = vsel %vm597, %v575, 0
      %v668 = vsel %vm597, %v576, 0
      %v671 = vsel %vm597, %v577, 0
      %v674 = vsel %vm597, %v578, 0
      %v677 = vsel %vm597, %v579, 0
      %v680 = vsel %vm597, %v580, 0
      %v683 = vsel %vm597, %v581, 0
      %v686 = vsel %vm597, %v582, 0
      %v689 = vsel %vm597, %v583, 0
      %v692 = vsel %vm597, %v584, 0
      %694 = vmatpush.bf16.msra.mxu0 0
      %695 = vmatpush.bf16.msra.mxu0 0
      %696 = vmatpush.bf16.msra.mxu0 0
      %697 = vmatpush.bf16.msra.mxu0 0
      %698 = vmatpush.bf16.msra.mxu0 0
      %699 = vmatpush.bf16.msra.mxu0 0
      %700 = vmatpush.bf16.msra.mxu0 %v594
      %701 = vmatpush.bf16.msra.mxu0 %v593
      %702 = vmatmul.bf16.gmra.mxu0 %v599
      %v703 = vpop.f32.mrf.mxu0
      %v704 = vadd.f32 %v423, %v703
      %v705 = vpop.f32.mrf.mxu0
      %v706 = vadd.f32 %v423, %v705
      %707 = vmatmul.bf16.gmra.mxu0 %v602
      %v708 = vpop.f32.mrf.mxu0
      %v709 = vadd.f32 %v423, %v708
      %v710 = vpop.f32.mrf.mxu0
      %v711 = vadd.f32 %v423, %v710
      %712 = vmatmul.bf16.gmra.mxu0 %v605
      %v713 = vpop.f32.mrf.mxu0
      %v714 = vadd.f32 %v423, %v713
      %v715 = vpop.f32.mrf.mxu0
      %v716 = vadd.f32 %v423, %v715
      %717 = vmatmul.bf16.gmra.mxu0 %v608
      %v718 = vpop.f32.mrf.mxu0
      %v719 = vadd.f32 %v423, %v718
      %v720 = vpop.f32.mrf.mxu0
      %v721 = vadd.f32 %v423, %v720
      %722 = vmatmul.bf16.gmra.mxu0 %v611
      %v723 = vpop.f32.mrf.mxu0
      %v724 = vadd.f32 %v423, %v723
      %v725 = vpop.f32.mrf.mxu0
      %v726 = vadd.f32 %v423, %v725
      %727 = vmatmul.bf16.gmra.mxu0 %v614
      %v728 = vpop.f32.mrf.mxu0
      %v729 = vadd.f32 %v423, %v728
      %v730 = vpop.f32.mrf.mxu0
      %v731 = vadd.f32 %v423, %v730
      %732 = vmatmul.bf16.gmra.mxu0 %v617
      %v733 = vpop.f32.mrf.mxu0
      %v734 = vadd.f32 %v423, %v733
      %v735 = vpop.f32.mrf.mxu0
      %v736 = vadd.f32 %v423, %v735
      %737 = vmatmul.bf16.gmra.mxu0 %v620
      %v738 = vpop.f32.mrf.mxu0
      %v739 = vadd.f32 %v423, %v738
      %v740 = vpop.f32.mrf.mxu0
      %v741 = vadd.f32 %v423, %v740
      %742 = vmatmul.bf16.gmra.mxu0 %v623
      %v743 = vpop.f32.mrf.mxu0
      %v744 = vadd.f32 %v423, %v743
      %v745 = vpop.f32.mrf.mxu0
      %v746 = vadd.f32 %v423, %v745
      %747 = vmatmul.bf16.gmra.mxu0 %v626
      %v748 = vpop.f32.mrf.mxu0
      %v749 = vadd.f32 %v423, %v748
      %v750 = vpop.f32.mrf.mxu0
      %v751 = vadd.f32 %v423, %v750
      %752 = vmatmul.bf16.gmra.mxu0 %v629
      %v753 = vpop.f32.mrf.mxu0
      %v754 = vadd.f32 %v423, %v753
      %v755 = vpop.f32.mrf.mxu0
      %v756 = vadd.f32 %v423, %v755
      %757 = vmatmul.bf16.gmra.mxu0 %v632
      %v758 = vpop.f32.mrf.mxu0
      %v759 = vadd.f32 %v423, %v758
      %v760 = vpop.f32.mrf.mxu0
      %v761 = vadd.f32 %v423, %v760
      %762 = vmatmul.bf16.gmra.mxu0 %v635
      %v763 = vpop.f32.mrf.mxu0
      %v764 = vadd.f32 %v423, %v763
      %v765 = vpop.f32.mrf.mxu0
      %v766 = vadd.f32 %v423, %v765
      %767 = vmatmul.bf16.gmra.mxu0 %v638
      %v768 = vpop.f32.mrf.mxu0
      %v769 = vadd.f32 %v423, %v768
      %v770 = vpop.f32.mrf.mxu0
      %v771 = vadd.f32 %v423, %v770
      %772 = vmatmul.bf16.gmra.mxu0 %v641
      %v773 = vpop.f32.mrf.mxu0
      %v774 = vadd.f32 %v423, %v773
      %v775 = vpop.f32.mrf.mxu0
      %v776 = vadd.f32 %v423, %v775
      %777 = vmatmul.bf16.gmra.mxu0 %v644
      %v778 = vpop.f32.mrf.mxu0
      %v779 = vadd.f32 %v423, %v778
      %v780 = vpop.f32.mrf.mxu0
      %v781 = vadd.f32 %v423, %v780
      %782 = vmatmul.bf16.gmra.mxu0 %v647
      %v783 = vpop.f32.mrf.mxu0
      %v784 = vadd.f32 %v423, %v783
      %v785 = vpop.f32.mrf.mxu0
      %v786 = vadd.f32 %v423, %v785
      %787 = vmatmul.bf16.gmra.mxu0 %v650
      %v788 = vpop.f32.mrf.mxu0
      %v789 = vadd.f32 %v423, %v788
      %v790 = vpop.f32.mrf.mxu0
      %v791 = vadd.f32 %v423, %v790
      %792 = vmatmul.bf16.gmra.mxu0 %v653
      %v793 = vpop.f32.mrf.mxu0
      %v794 = vadd.f32 %v423, %v793
      %v795 = vpop.f32.mrf.mxu0
      %v796 = vadd.f32 %v423, %v795
      %797 = vmatmul.bf16.gmra.mxu0 %v656
      %v798 = vpop.f32.mrf.mxu0
      %v799 = vadd.f32 %v423, %v798
      %v800 = vpop.f32.mrf.mxu0
      %v801 = vadd.f32 %v423, %v800
      %802 = vmatmul.bf16.gmra.mxu0 %v659
      %v803 = vpop.f32.mrf.mxu0
      %v804 = vadd.f32 %v423, %v803
      %v805 = vpop.f32.mrf.mxu0
      %v806 = vadd.f32 %v423, %v805
      %807 = vmatmul.bf16.gmra.mxu0 %v662
      %v808 = vpop.f32.mrf.mxu0
      %v809 = vadd.f32 %v423, %v808
      %v810 = vpop.f32.mrf.mxu0
      %v811 = vadd.f32 %v423, %v810
      %812 = vmatmul.bf16.gmra.mxu0 %v665
      %v813 = vpop.f32.mrf.mxu0
      %v814 = vadd.f32 %v423, %v813
      %v815 = vpop.f32.mrf.mxu0
      %v816 = vadd.f32 %v423, %v815
      %817 = vmatmul.bf16.gmra.mxu0 %v668
      %v818 = vpop.f32.mrf.mxu0
      %v819 = vadd.f32 %v423, %v818
      %v820 = vpop.f32.mrf.mxu0
      %v821 = vadd.f32 %v423, %v820
      %822 = vmatmul.bf16.gmra.mxu0 %v671
      %v823 = vpop.f32.mrf.mxu0
      %v824 = vadd.f32 %v423, %v823
      %v825 = vpop.f32.mrf.mxu0
      %v826 = vadd.f32 %v423, %v825
      %827 = vmatmul.bf16.gmra.mxu0 %v674
      %v828 = vpop.f32.mrf.mxu0
      %v829 = vadd.f32 %v423, %v828
      %v830 = vpop.f32.mrf.mxu0
      %v831 = vadd.f32 %v423, %v830
      %832 = vmatmul.bf16.gmra.mxu0 %v677
      %v833 = vpop.f32.mrf.mxu0
      %v834 = vadd.f32 %v423, %v833
      %v835 = vpop.f32.mrf.mxu0
      %v836 = vadd.f32 %v423, %v835
      %837 = vmatmul.bf16.gmra.mxu0 %v680
      %v838 = vpop.f32.mrf.mxu0
      %v839 = vadd.f32 %v423, %v838
      %v840 = vpop.f32.mrf.mxu0
      %v841 = vadd.f32 %v423, %v840
      %842 = vmatmul.bf16.gmra.mxu0 %v683
      %v843 = vpop.f32.mrf.mxu0
      %v844 = vadd.f32 %v423, %v843
      %v845 = vpop.f32.mrf.mxu0
      %v846 = vadd.f32 %v423, %v845
      %847 = vmatmul.bf16.gmra.mxu0 %v686
      %v848 = vpop.f32.mrf.mxu0
      %v849 = vadd.f32 %v423, %v848
      %v850 = vpop.f32.mrf.mxu0
      %v851 = vadd.f32 %v423, %v850
      %852 = vmatmul.bf16.gmra.mxu0 %v689
      %v853 = vpop.f32.mrf.mxu0
      %v854 = vadd.f32 %v423, %v853
      %v855 = vpop.f32.mrf.mxu0
      %v856 = vadd.f32 %v423, %v855
      %857 = vmatmul.bf16.gmra.mxu0 %v692
      %v858 = vpop.f32.mrf.mxu0
      %v859 = vadd.f32 %v423, %v858
      %v860 = vpop.f32.mrf.mxu0
      %v861 = vadd.f32 %v423, %v860
      %862 = vdwg.mxu0
      %v863 = vmax.f32 %v704, 0.0
      %v864 = vmax.f32 %v706, 0.0
      %v865 = vmax.f32 %v709, 0.0
      %v866 = vmax.f32 %v711, 0.0
      %v867 = vmax.f32 %v714, 0.0
      %v868 = vmax.f32 %v716, 0.0
      %v869 = vmax.f32 %v719, 0.0
      %v870 = vmax.f32 %v721, 0.0
      %v871 = vmax.f32 %v724, 0.0
      %v872 = vmax.f32 %v726, 0.0
      %v873 = vmax.f32 %v729, 0.0
      %v874 = vmax.f32 %v731, 0.0
      %v875 = vmax.f32 %v734, 0.0
      %v876 = vmax.f32 %v736, 0.0
      %v877 = vmax.f32 %v739, 0.0
      %v878 = vmax.f32 %v741, 0.0
      %v879 = vmax.f32 %v744, 0.0
      %v880 = vmax.f32 %v746, 0.0
      %v881 = vmax.f32 %v749, 0.0
      %v882 = vmax.f32 %v751, 0.0
      %v883 = vmax.f32 %v754, 0.0
      %v884 = vmax.f32 %v756, 0.0
      %v885 = vmax.f32 %v759, 0.0
      %v886 = vmax.f32 %v761, 0.0
      %v887 = vmax.f32 %v764, 0.0
      %v888 = vmax.f32 %v766, 0.0
      %v889 = vmax.f32 %v769, 0.0
      %v890 = vmax.f32 %v771, 0.0
      %v891 = vmax.f32 %v774, 0.0
      %v892 = vmax.f32 %v776, 0.0
      %v893 = vmax.f32 %v779, 0.0
      %v894 = vmax.f32 %v781, 0.0
      %v895 = vmax.f32 %v784, 0.0
      %v896 = vmax.f32 %v786, 0.0
      %v897 = vmax.f32 %v789, 0.0
      %v898 = vmax.f32 %v791, 0.0
      %v899 = vmax.f32 %v794, 0.0
      %v900 = vmax.f32 %v796, 0.0
      %v901 = vmax.f32 %v799, 0.0
      %v902 = vmax.f32 %v801, 0.0
      %v903 = vmax.f32 %v804, 0.0
      %v904 = vmax.f32 %v806, 0.0
      %v905 = vmax.f32 %v809, 0.0
      %v906 = vmax.f32 %v811, 0.0
      %v907 = vmax.f32 %v814, 0.0
      %v908 = vmax.f32 %v816, 0.0
      %v909 = vmax.f32 %v819, 0.0
      %v910 = vmax.f32 %v821, 0.0
      %v911 = vmax.f32 %v824, 0.0
      %v912 = vmax.f32 %v826, 0.0
      %v913 = vmax.f32 %v829, 0.0
      %v914 = vmax.f32 %v831, 0.0
      %v915 = vmax.f32 %v834, 0.0
      %v916 = vmax.f32 %v836, 0.0
      %v917 = vmax.f32 %v839, 0.0
      %v918 = vmax.f32 %v841, 0.0
      %v919 = vmax.f32 %v844, 0.0
      %v920 = vmax.f32 %v846, 0.0
      %v921 = vmax.f32 %v849, 0.0
      %v922 = vmax.f32 %v851, 0.0
      %v923 = vmax.f32 %v854, 0.0
      %v924 = vmax.f32 %v856, 0.0
      %v925 = vmax.f32 %v859, 0.0
      %v926 = vmax.f32 %v861, 0.0
      %v927 = vpack.c.bf16 %v864, %v863
      %v928 = vpack.c.bf16 %v866, %v865
      %v929 = vpack.c.bf16 %v868, %v867
      %v930 = vpack.c.bf16 %v870, %v869
      %v931 = vpack.c.bf16 %v872, %v871
      %v932 = vpack.c.bf16 %v874, %v873
      %v933 = vpack.c.bf16 %v876, %v875
      %v934 = vpack.c.bf16 %v878, %v877
      %v935 = vpack.c.bf16 %v880, %v879
      %v936 = vpack.c.bf16 %v882, %v881
      %v937 = vpack.c.bf16 %v884, %v883
      %v938 = vpack.c.bf16 %v886, %v885
      %v939 = vpack.c.bf16 %v888, %v887
      %v940 = vpack.c.bf16 %v890, %v889
      %v941 = vpack.c.bf16 %v892, %v891
      %v942 = vpack.c.bf16 %v894, %v893
      %v943 = vpack.c.bf16 %v896, %v895
      %v944 = vpack.c.bf16 %v898, %v897
      %v945 = vpack.c.bf16 %v900, %v899
      %v946 = vpack.c.bf16 %v902, %v901
      %v947 = vpack.c.bf16 %v904, %v903
      %v948 = vpack.c.bf16 %v906, %v905
      %v949 = vpack.c.bf16 %v908, %v907
      %v950 = vpack.c.bf16 %v910, %v909
      %v951 = vpack.c.bf16 %v912, %v911
      %v952 = vpack.c.bf16 %v914, %v913
      %v953 = vpack.c.bf16 %v916, %v915
      %v954 = vpack.c.bf16 %v918, %v917
      %v955 = vpack.c.bf16 %v920, %v919
      %v956 = vpack.c.bf16 %v922, %v921
      %v957 = vpack.c.bf16 %v924, %v923
      %v958 = vpack.c.bf16 %v926, %v925
      %v959 = vld [vmem:[%s336] sm:$0xf]
      %v960 = vld [vmem:[%s336 + $0x4] sm:$0xf]
      %v961 = vld [vmem:[%s336 + $0x8] sm:$0xf]
      %v962 = vld [vmem:[%s336 + $0xc] sm:$0xf]
      %v963 = vld [vmem:[%s336 + $0x10] sm:$0xf]
      %v964 = vld [vmem:[%s336 + $0x14] sm:$0xf]
      %v965 = vld [vmem:[%s336 + $0x18] sm:$0xf]
      %v966 = vld [vmem:[%s336 + $0x1c] sm:$0xf]
      %v967 = vld [vmem:[%s336 + $0x20] sm:$0xf]
      %v968 = vld [vmem:[%s336 + $0x24] sm:$0xf]
      %v969 = vld [vmem:[%s336 + $0x28] sm:$0xf]
      %v970 = vld [vmem:[%s336 + $0x2c] sm:$0xf]
      %v971 = vld [vmem:[%s336 + $0x30] sm:$0xf]
      %v972 = vld [vmem:[%s336 + $0x34] sm:$0xf]
      %v973 = vld [vmem:[%s336 + $0x38] sm:$0xf]
      %v974 = vld [vmem:[%s336 + $0x3c] sm:$0xf]
      %v975 = vld [vmem:[%s343] sm:$0x1]
      %v977 = vperm.slane %v975, 0
      %v995 = vunpack.c.l.b16 %v959
      %v996 = vunpack.c.l.b16 %v960
      %v997 = vunpack.c.l.b16 %v961
      %v998 = vunpack.c.l.b16 %v962
      %v999 = vunpack.c.l.b16 %v963
      %v1000 = vunpack.c.l.b16 %v964
      %v1001 = vunpack.c.l.b16 %v965
      %v1002 = vunpack.c.l.b16 %v966
      %v1003 = vunpack.c.l.b16 %v967
      %v1004 = vunpack.c.l.b16 %v968
      %v1005 = vunpack.c.l.b16 %v969
      %v1006 = vunpack.c.l.b16 %v970
      %v1007 = vunpack.c.l.b16 %v971
      %v1008 = vunpack.c.l.b16 %v972
      %v1009 = vunpack.c.l.b16 %v973
      %v1010 = vunpack.c.l.b16 %v974
      %v1011 = vpack.c.b16 %v996, %v995
      %v1012 = vpack.c.b16 %v998, %v997
      %v1013 = vpack.c.b16 %v1000, %v999
      %v1014 = vpack.c.b16 %v1002, %v1001
      %v1015 = vpack.c.b16 %v1004, %v1003
      %v1016 = vpack.c.b16 %v1006, %v1005
      %v1017 = vpack.c.b16 %v1008, %v1007
      %v1018 = vpack.c.b16 %v1010, %v1009
      %1027 = vmatpush.bf16.msra.mxu0 %v1018
      %1028 = vmatpush.bf16.msra.mxu0 %v1017
      %1029 = vmatpush.bf16.msra.mxu0 %v1016
      %1030 = vmatpush.bf16.msra.mxu0 %v1015
      %1031 = vmatpush.bf16.msra.mxu0 %v1014
      %1032 = vmatpush.bf16.msra.mxu0 %v1013
      %1033 = vmatpush.bf16.msra.mxu0 %v1012
      %1034 = vmatpush.bf16.msra.mxu0 %v1011
      %1035 = vmatmul.bf16.gmra.mxu0 %v927
      %v1036 = vpop.f32.mrf.mxu0
      %v1037 = vadd.f32 %v977, %v1036
      %v1038 = vpop.f32.mrf.mxu0
      %v1039 = vadd.f32 %v977, %v1038
      %1040 = vmatmul.bf16.gmra.mxu0 %v928
      %v1041 = vpop.f32.mrf.mxu0
      %v1042 = vadd.f32 %v977, %v1041
      %v1043 = vpop.f32.mrf.mxu0
      %v1044 = vadd.f32 %v977, %v1043
      %1045 = vmatmul.bf16.gmra.mxu0 %v929
      %v1046 = vpop.f32.mrf.mxu0
      %v1047 = vadd.f32 %v977, %v1046
      %v1048 = vpop.f32.mrf.mxu0
      %v1049 = vadd.f32 %v977, %v1048
      %1050 = vmatmul.bf16.gmra.mxu0 %v930
      %v1051 = vpop.f32.mrf.mxu0
      %v1052 = vadd.f32 %v977, %v1051
      %v1053 = vpop.f32.mrf.mxu0
      %v1054 = vadd.f32 %v977, %v1053
      %1055 = vmatmul.bf16.gmra.mxu0 %v931
      %v1056 = vpop.f32.mrf.mxu0
      %v1057 = vadd.f32 %v977, %v1056
      %v1058 = vpop.f32.mrf.mxu0
      %v1059 = vadd.f32 %v977, %v1058
      %1060 = vmatmul.bf16.gmra.mxu0 %v932
      %v1061 = vpop.f32.mrf.mxu0
      %v1062 = vadd.f32 %v977, %v1061
      %v1063 = vpop.f32.mrf.mxu0
      %v1064 = vadd.f32 %v977, %v1063
      %1065 = vmatmul.bf16.gmra.mxu0 %v933
      %v1066 = vpop.f32.mrf.mxu0
      %v1067 = vadd.f32 %v977, %v1066
      %v1068 = vpop.f32.mrf.mxu0
      %v1069 = vadd.f32 %v977, %v1068
      %1070 = vmatmul.bf16.gmra.mxu0 %v934
      %v1071 = vpop.f32.mrf.mxu0
      %v1072 = vadd.f32 %v977, %v1071
      %v1073 = vpop.f32.mrf.mxu0
      %v1074 = vadd.f32 %v977, %v1073
      %1075 = vmatmul.bf16.gmra.mxu0 %v935
      %v1076 = vpop.f32.mrf.mxu0
      %v1077 = vadd.f32 %v977, %v1076
      %v1078 = vpop.f32.mrf.mxu0
      %v1079 = vadd.f32 %v977, %v1078
      %1080 = vmatmul.bf16.gmra.mxu0 %v936
      %v1081 = vpop.f32.mrf.mxu0
      %v1082 = vadd.f32 %v977, %v1081
      %v1083 = vpop.f32.mrf.mxu0
      %v1084 = vadd.f32 %v977, %v1083
      %1085 = vmatmul.bf16.gmra.mxu0 %v937
      %v1086 = vpop.f32.mrf.mxu0
      %v1087 = vadd.f32 %v977, %v1086
      %v1088 = vpop.f32.mrf.mxu0
      %v1089 = vadd.f32 %v977, %v1088
      %1090 = vmatmul.bf16.gmra.mxu0 %v938
      %v1091 = vpop.f32.mrf.mxu0
      %v1092 = vadd.f32 %v977, %v1091
      %v1093 = vpop.f32.mrf.mxu0
      %v1094 = vadd.f32 %v977, %v1093
      %1095 = vmatmul.bf16.gmra.mxu0 %v939
      %v1096 = vpop.f32.mrf.mxu0
      %v1097 = vadd.f32 %v977, %v1096
      %v1098 = vpop.f32.mrf.mxu0
      %v1099 = vadd.f32 %v977, %v1098
      %1100 = vmatmul.bf16.gmra.mxu0 %v940
      %v1101 = vpop.f32.mrf.mxu0
      %v1102 = vadd.f32 %v977, %v1101
      %v1103 = vpop.f32.mrf.mxu0
      %v1104 = vadd.f32 %v977, %v1103
      %1105 = vmatmul.bf16.gmra.mxu0 %v941
      %v1106 = vpop.f32.mrf.mxu0
      %v1107 = vadd.f32 %v977, %v1106
      %v1108 = vpop.f32.mrf.mxu0
      %v1109 = vadd.f32 %v977, %v1108
      %1110 = vmatmul.bf16.gmra.mxu0 %v942
      %v1111 = vpop.f32.mrf.mxu0
      %v1112 = vadd.f32 %v977, %v1111
      %v1113 = vpop.f32.mrf.mxu0
      %v1114 = vadd.f32 %v977, %v1113
      %1115 = vmatmul.bf16.gmra.mxu0 %v943
      %v1116 = vpop.f32.mrf.mxu0
      %v1117 = vadd.f32 %v977, %v1116
      %v1118 = vpop.f32.mrf.mxu0
      %v1119 = vadd.f32 %v977, %v1118
      %1120 = vmatmul.bf16.gmra.mxu0 %v944
      %v1121 = vpop.f32.mrf.mxu0
      %v1122 = vadd.f32 %v977, %v1121
      %v1123 = vpop.f32.mrf.mxu0
      %v1124 = vadd.f32 %v977, %v1123
      %1125 = vmatmul.bf16.gmra.mxu0 %v945
      %v1126 = vpop.f32.mrf.mxu0
      %v1127 = vadd.f32 %v977, %v1126
      %v1128 = vpop.f32.mrf.mxu0
      %v1129 = vadd.f32 %v977, %v1128
      %1130 = vmatmul.bf16.gmra.mxu0 %v946
      %v1131 = vpop.f32.mrf.mxu0
      %v1132 = vadd.f32 %v977, %v1131
      %v1133 = vpop.f32.mrf.mxu0
      %v1134 = vadd.f32 %v977, %v1133
      %1135 = vmatmul.bf16.gmra.mxu0 %v947
      %v1136 = vpop.f32.mrf.mxu0
      %v1137 = vadd.f32 %v977, %v1136
      %v1138 = vpop.f32.mrf.mxu0
      %v1139 = vadd.f32 %v977, %v1138
      %1140 = vmatmul.bf16.gmra.mxu0 %v948
      %v1141 = vpop.f32.mrf.mxu0
      %v1142 = vadd.f32 %v977, %v1141
      %v1143 = vpop.f32.mrf.mxu0
      %v1144 = vadd.f32 %v977, %v1143
      %1145 = vmatmul.bf16.gmra.mxu0 %v949
      %v1146 = vpop.f32.mrf.mxu0
      %v1147 = vadd.f32 %v977, %v1146
      %v1148 = vpop.f32.mrf.mxu0
      %v1149 = vadd.f32 %v977, %v1148
      %1150 = vmatmul.bf16.gmra.mxu0 %v950
      %v1151 = vpop.f32.mrf.mxu0
      %v1152 = vadd.f32 %v977, %v1151
      %v1153 = vpop.f32.mrf.mxu0
      %v1154 = vadd.f32 %v977, %v1153
      %1155 = vmatmul.bf16.gmra.mxu0 %v951
      %v1156 = vpop.f32.mrf.mxu0
      %v1157 = vadd.f32 %v977, %v1156
      %v1158 = vpop.f32.mrf.mxu0
      %v1159 = vadd.f32 %v977, %v1158
      %1160 = vmatmul.bf16.gmra.mxu0 %v952
      %v1161 = vpop.f32.mrf.mxu0
      %v1162 = vadd.f32 %v977, %v1161
      %v1163 = vpop.f32.mrf.mxu0
      %v1164 = vadd.f32 %v977, %v1163
      %1165 = vmatmul.bf16.gmra.mxu0 %v953
      %v1166 = vpop.f32.mrf.mxu0
      %v1167 = vadd.f32 %v977, %v1166
      %v1168 = vpop.f32.mrf.mxu0
      %v1169 = vadd.f32 %v977, %v1168
      %1170 = vmatmul.bf16.gmra.mxu0 %v954
      %v1171 = vpop.f32.mrf.mxu0
      %v1172 = vadd.f32 %v977, %v1171
      %v1173 = vpop.f32.mrf.mxu0
      %v1174 = vadd.f32 %v977, %v1173
      %1175 = vmatmul.bf16.gmra.mxu0 %v955
      %v1176 = vpop.f32.mrf.mxu0
      %v1177 = vadd.f32 %v977, %v1176
      %v1178 = vpop.f32.mrf.mxu0
      %v1179 = vadd.f32 %v977, %v1178
      %1180 = vmatmul.bf16.gmra.mxu0 %v956
      %v1181 = vpop.f32.mrf.mxu0
      %v1182 = vadd.f32 %v977, %v1181
      %v1183 = vpop.f32.mrf.mxu0
      %v1184 = vadd.f32 %v977, %v1183
      %1185 = vmatmul.bf16.gmra.mxu0 %v957
      %v1186 = vpop.f32.mrf.mxu0
      %v1187 = vadd.f32 %v977, %v1186
      %v1188 = vpop.f32.mrf.mxu0
      %v1189 = vadd.f32 %v977, %v1188
      %1190 = vmatmul.bf16.gmra.mxu0 %v958
      %v1191 = vpop.f32.mrf.mxu0
      %v1192 = vadd.f32 %v977, %v1191
      %v1193 = vpop.f32.mrf.mxu0
      %v1194 = vadd.f32 %v977, %v1193
      %1195 = vdwg.mxu0
      %v1196 = vmax.f32 %v1037, 0.0
      %v1197 = vmax.f32 %v1039, 0.0
      %v1198 = vmax.f32 %v1042, 0.0
      %v1199 = vmax.f32 %v1044, 0.0
      %v1200 = vmax.f32 %v1047, 0.0
      %v1201 = vmax.f32 %v1049, 0.0
      %v1202 = vmax.f32 %v1052, 0.0
      %v1203 = vmax.f32 %v1054, 0.0
      %v1204 = vmax.f32 %v1057, 0.0
      %v1205 = vmax.f32 %v1059, 0.0
      %v1206 = vmax.f32 %v1062, 0.0
      %v1207 = vmax.f32 %v1064, 0.0
      %v1208 = vmax.f32 %v1067, 0.0
      %v1209 = vmax.f32 %v1069, 0.0
      %v1210 = vmax.f32 %v1072, 0.0
      %v1211 = vmax.f32 %v1074, 0.0
      %v1212 = vmax.f32 %v1077, 0.0
      %v1213 = vmax.f32 %v1079, 0.0
      %v1214 = vmax.f32 %v1082, 0.0
      %v1215 = vmax.f32 %v1084, 0.0
      %v1216 = vmax.f32 %v1087, 0.0
      %v1217 = vmax.f32 %v1089, 0.0
      %v1218 = vmax.f32 %v1092, 0.0
      %v1219 = vmax.f32 %v1094, 0.0
      %v1220 = vmax.f32 %v1097, 0.0
      %v1221 = vmax.f32 %v1099, 0.0
      %v1222 = vmax.f32 %v1102, 0.0
      %v1223 = vmax.f32 %v1104, 0.0
      %v1224 = vmax.f32 %v1107, 0.0
      %v1225 = vmax.f32 %v1109, 0.0
      %v1226 = vmax.f32 %v1112, 0.0
      %v1227 = vmax.f32 %v1114, 0.0
      %v1228 = vmax.f32 %v1117, 0.0
      %v1229 = vmax.f32 %v1119, 0.0
      %v1230 = vmax.f32 %v1122, 0.0
      %v1231 = vmax.f32 %v1124, 0.0
      %v1232 = vmax.f32 %v1127, 0.0
      %v1233 = vmax.f32 %v1129, 0.0
      %v1234 = vmax.f32 %v1132, 0.0
      %v1235 = vmax.f32 %v1134, 0.0
      %v1236 = vmax.f32 %v1137, 0.0
      %v1237 = vmax.f32 %v1139, 0.0
      %v1238 = vmax.f32 %v1142, 0.0
      %v1239 = vmax.f32 %v1144, 0.0
      %v1240 = vmax.f32 %v1147, 0.0
      %v1241 = vmax.f32 %v1149, 0.0
      %v1242 = vmax.f32 %v1152, 0.0
      %v1243 = vmax.f32 %v1154, 0.0
      %v1244 = vmax.f32 %v1157, 0.0
      %v1245 = vmax.f32 %v1159, 0.0
      %v1246 = vmax.f32 %v1162, 0.0
      %v1247 = vmax.f32 %v1164, 0.0
      %v1248 = vmax.f32 %v1167, 0.0
      %v1249 = vmax.f32 %v1169, 0.0
      %v1250 = vmax.f32 %v1172, 0.0
      %v1251 = vmax.f32 %v1174, 0.0
      %v1252 = vmax.f32 %v1177, 0.0
      %v1253 = vmax.f32 %v1179, 0.0
      %v1254 = vmax.f32 %v1182, 0.0
      %v1255 = vmax.f32 %v1184, 0.0
      %v1256 = vmax.f32 %v1187, 0.0
      %v1257 = vmax.f32 %v1189, 0.0
      %v1258 = vmax.f32 %v1192, 0.0
      %v1259 = vmax.f32 %v1194, 0.0
      %1260 = vst [vmem:[%s350] sm:$0xff] %v1196
      %1261 = vst [vmem:[%s350 + $0x8] sm:$0xff] %v1197
      %1262 = vst [vmem:[%s350 + $0x10] sm:$0xff] %v1198
      %1263 = vst [vmem:[%s350 + $0x18] sm:$0xff] %v1199
      %1264 = vst [vmem:[%s350 + $0x20] sm:$0xff] %v1200
      %1265 = vst [vmem:[%s350 + $0x28] sm:$0xff] %v1201
      %1266 = vst [vmem:[%s350 + $0x30] sm:$0xff] %v1202
      %1267 = vst [vmem:[%s350 + $0x38] sm:$0xff] %v1203
      %1268 = vst [vmem:[%s350 + $0x40] sm:$0xff] %v1204
      %1269 = vst [vmem:[%s350 + $0x48] sm:$0xff] %v1205
      %1270 = vst [vmem:[%s350 + $0x50] sm:$0xff] %v1206
      %1271 = vst [vmem:[%s350 + $0x58] sm:$0xff] %v1207
      %1272 = vst [vmem:[%s350 + $0x60] sm:$0xff] %v1208
      %1273 = vst [vmem:[%s350 + $0x68] sm:$0xff] %v1209
      %1274 = vst [vmem:[%s350 + $0x70] sm:$0xff] %v1210
      %1275 = vst [vmem:[%s350 + $0x78] sm:$0xff] %v1211
      %1276 = vst [vmem:[%s350 + $0x80] sm:$0xff] %v1212
      %1277 = vst [vmem:[%s350 + $0x88] sm:$0xff] %v1213
      %1278 = vst [vmem:[%s350 + $0x90] sm:$0xff] %v1214
      %1279 = vst [vmem:[%s350 + $0x98] sm:$0xff] %v1215
      %1280 = vst [vmem:[%s350 + $0xa0] sm:$0xff] %v1216
      %1281 = vst [vmem:[%s350 + $0xa8] sm:$0xff] %v1217
      %1282 = vst [vmem:[%s350 + $0xb0] sm:$0xff] %v1218
      %1283 = vst [vmem:[%s350 + $0xb8] sm:$0xff] %v1219
      %1284 = vst [vmem:[%s350 + $0xc0] sm:$0xff] %v1220
      %1285 = vst [vmem:[%s350 + $0xc8] sm:$0xff] %v1221
      %1286 = vst [vmem:[%s350 + $0xd0] sm:$0xff] %v1222
      %1287 = vst [vmem:[%s350 + $0xd8] sm:$0xff] %v1223
      %1288 = vst [vmem:[%s350 + $0xe0] sm:$0xff] %v1224
      %1289 = vst [vmem:[%s350 + $0xe8] sm:$0xff] %v1225
      %1290 = vst [vmem:[%s350 + $0xf0] sm:$0xff] %v1226
      %1291 = vst [vmem:[%s350 + $0xf8] sm:$0xff] %v1227
      %1292 = vst [vmem:[%s350 + $0x100] sm:$0xff] %v1228
      %1293 = vst [vmem:[%s350 + $0x108] sm:$0xff] %v1229
      %1294 = vst [vmem:[%s350 + $0x110] sm:$0xff] %v1230
      %1295 = vst [vmem:[%s350 + $0x118] sm:$0xff] %v1231
      %1296 = vst [vmem:[%s350 + $0x120] sm:$0xff] %v1232
      %1297 = vst [vmem:[%s350 + $0x128] sm:$0xff] %v1233
      %1298 = vst [vmem:[%s350 + $0x130] sm:$0xff] %v1234
      %1299 = vst [vmem:[%s350 + $0x138] sm:$0xff] %v1235
      %1300 = vst [vmem:[%s350 + $0x140] sm:$0xff] %v1236
      %1301 = vst [vmem:[%s350 + $0x148] sm:$0xff] %v1237
      %1302 = vst [vmem:[%s350 + $0x150] sm:$0xff] %v1238
      %1303 = vst [vmem:[%s350 + $0x158] sm:$0xff] %v1239
      %1304 = vst [vmem:[%s350 + $0x160] sm:$0xff] %v1240
      %1305 = vst [vmem:[%s350 + $0x168] sm:$0xff] %v1241
      %1306 = vst [vmem:[%s350 + $0x170] sm:$0xff] %v1242
      %1307 = vst [vmem:[%s350 + $0x178] sm:$0xff] %v1243
      %1308 = vst [vmem:[%s350 + $0x180] sm:$0xff] %v1244
      %1309 = vst [vmem:[%s350 + $0x188] sm:$0xff] %v1245
      %1310 = vst [vmem:[%s350 + $0x190] sm:$0xff] %v1246
      %1311 = vst [vmem:[%s350 + $0x198] sm:$0xff] %v1247
      %1312 = vst [vmem:[%s350 + $0x1a0] sm:$0xff] %v1248
      %1313 = vst [vmem:[%s350 + $0x1a8] sm:$0xff] %v1249
      %1314 = vst [vmem:[%s350 + $0x1b0] sm:$0xff] %v1250
      %1315 = vst [vmem:[%s350 + $0x1b8] sm:$0xff] %v1251
      %1316 = vst [vmem:[%s350 + $0x1c0] sm:$0xff] %v1252
      %1317 = vst [vmem:[%s350 + $0x1c8] sm:$0xff] %v1253
      %1318 = vst [vmem:[%s350 + $0x1d0] sm:$0xff] %v1254
      %1319 = vst [vmem:[%s350 + $0x1d8] sm:$0xff] %v1255
      %1320 = vst [vmem:[%s350 + $0x1e0] sm:$0xff] %v1256
      %1321 = vst [vmem:[%s350 + $0x1e8] sm:$0xff] %v1257
      %1322 = vst [vmem:[%s350 + $0x1f0] sm:$0xff] %v1258
      %1323 = vst [vmem:[%s350 + $0x1f8] sm:$0xff] %v1259
      %s1324 = smul.u32 64, %s16
      %p1325 = scmp.lt.s32.totalorder %s1324, 127
      %s1326 = scalar_select %p1325, %s1324, 127
      %s1327 = smul.addr %s1326, 8
      %s1328 = scalar_lea.vmem %s5, %s1327
      // Predicated region
      $region41: #{_lambda_.1} parent=39 // pred_check
        %p1329 = pneg %p180
      $region42: #{_lambda_.1} parent=39 // pred_check_branch
        %1331 = sbr.rel (%p1329) target = $region44
      $region43: #{_lambda_.1} parent=39 // pred_region
        %s1332 = smul.u32 64, %s16
      $region44: #{_lambda_.1} parent=39 // pred_fallthru
        _
    $region40: #{_lambda_.1} parent=5 // pred_fallthru
      _
    %p1333 = scmp.le.s32.totalorder 2, %s11
    // Predicated region
    $region45: #{_lambda_.1} parent=5 // pred_check
      %p1334 = pneg %p1333
    $region46: #{_lambda_.1} parent=5 // pred_check_branch
      %1336 = sbr.rel (%p1334) target = $region48
    $region47: #{_lambda_.1} parent=5 // pred_region
      %s1337 = ssub.s32 %s11, 2
      // Predicated region
      $region49: #{_lambda_.1} parent=47 // pred_check
        %p1338 = pneg %p186
      $region50: #{_lambda_.1} parent=47 // pred_check_branch
        %1340 = sbr.rel (%p1338) target = $region52
      $region51: #{_lambda_.1} parent=47 // pred_region
        %s1341 = smul.u32 64, %s17
        %p1342 = scmp.lt.s32.totalorder %s1341, 127
        %s1343 = scalar_select %p1342, %s1341, 127
        %s1344 = smul.addr %s1343, 8
        %s1345 = scalar_lea.vmem %s5, %s1344
      $region52: #{_lambda_.1} parent=47 // pred_fallthru
        _
    $region48: #{_lambda_.1} parent=5 // pred_fallthru
      _
  $region6: #{_lambda_.1} parent=0 // loop_footer
    %s15 = sadd.s32 1, %s11
  $region7: #{_lambda_.1} parent=0 // loop_footer_branch
    %10 = sbr.rel target = $region3
  $region8: #{_lambda_.1} parent=0 // loop_exit
    _

</llo_original>
